<compile_context>
chip_gen: v6e
topology: v6e:2x2x1
jax: 0.10.0
libtpu: 0.0.40
codegen_flags: <defaults>
</compile_context>

<pallas_src>
import jax
import jax.numpy as jnp
from jax import lax
from jax.experimental import pallas as pl
from jax.experimental.pallas import tpu as pltpu


_LANE = 128      # lane width (last-dim vreg axis)
_SUBLANE = 8     # sublane width (second-to-last vreg axis)

_SMALL_T_XLA_THRESHOLD = 512   # below this, plain XLA beats a custom call


def _round_up(x, m):
    return ((x + m - 1) // m) * m


def _choose_tiling(t, tile_m):
    """Balanced, sublane-aligned row tiles; avoids near-empty last tiles."""
    t8 = _round_up(max(int(t), 1), _SUBLANE)
    tile_m = max(_SUBLANE, _round_up(int(tile_m), _SUBLANE))
    ntiles = -(-t8 // tile_m)
    tile = _round_up(-(-t8 // ntiles), _SUBLANE)
    return tile, ntiles, tile * ntiles


# ----------------------------- Pallas kernel + wrapper -----------------------

def fused_gather_gcn_classifier(x, target_idx, wg_pad, bg_pad, wc_pad, bc_pad,
                                *, out_dtype=None, tile_m=512):
    """y_pad[r] = relu(X[tgt[r]] @ wg_pad + bg_pad) @ wc_pad + bc_pad, row-tiled.

    The target-row gather is fused into the kernel: indices live in SMEM
    (scalar prefetch), X stays in HBM, each grid step DMA-gathers its tile of
    rows into a VMEM scratch buffer and runs both matmuls in the same
    invocation (h never leaves VMEM/vregs).  Rows >= len(target_idx) in the
    padded output are zeroed in-kernel.

    x:       (num_nodes, w_in)   node features (HBM, any float dtype)
    wg_pad:  (w_in, w_out_pad)   gcn weight, transposed + lane-padded
    bg_pad:  (1, w_out_pad)      f32
    wc_pad:  (w_out_pad, nc_pad) channel-folded classifier weight, nc_pad%128==0
    bc_pad:  (1, nc_pad)         f32
    returns  (t_pad, nc_pad); caller slices to (T, num_class).
    """
    t = int(target_idx.shape[0])
    num_nodes, w_in = x.shape
    w_out_pad = wg_pad.shape[1]
    nc_pad = wc_pad.shape[1]
    out_dtype = x.dtype if out_dtype is None else out_dtype

    tile, ntiles, t_pad = _choose_tiling(t, tile_m)
    # Pad indices with 0 (a valid row) so padded-row DMAs stay in bounds;
    # their outputs are zeroed by the in-kernel mask below.
    tgt = jnp.zeros((t_pad,), jnp.int32).at[:t].set(target_idx.astype(jnp.int32))

    def kernel(tgt_ref, x_hbm, wg_ref, bg_ref, wc_ref, bc_ref, o_ref,
               xbuf_ref, sem):
        i = pl.program_id(0)
        base = pl.multiple_of(i * tile, _SUBLANE)

        # --- fused gather: this tile's target rows, HBM -> VMEM row DMAs ----
        @pl.loop(0, tile)
        def _issue(r):
            row = tgt_ref[base + r]
            pltpu.make_async_copy(x_hbm.at[pl.ds(row, 1), :],
                                  xbuf_ref.at[pl.ds(r, 1), :],
                                  sem).start()

        @pl.loop(0, tile)
        def _wait(r):
            # Same-shaped descriptor => waits for exactly one row copy.
            pltpu.make_async_copy(x_hbm.at[pl.ds(0, 1), :],
                                  xbuf_ref.at[pl.ds(r, 1), :],
                                  sem).wait()

        # --- gcn + ReLU + channel-folded classifier, f32 accumulation -------
        xt = xbuf_ref[...].astype(wg_ref.dtype)
        h = jnp.dot(xt, wg_ref[...], preferred_element_type=jnp.float32)
        h = jnp.maximum(h + bg_ref[...], 0.0)
        y = jnp.dot(h.astype(wc_ref.dtype), wc_ref[...],
                    preferred_element_type=jnp.float32)
        y = y + bc_ref[...]

        # Zero padded rows (t_pad > T) so y_pad never holds garbage.
        rows = base + lax.broadcasted_iota(jnp.int32, y.shape, 0)
        o_ref[...] = jnp.where(rows < t, y, 0.0).astype(o_ref.dtype)

    return pl.pallas_call(
        kernel,
        out_shape=jax.ShapeDtypeStruct((t_pad, nc_pad), out_dtype),
        grid_spec=pltpu.PrefetchScalarGridSpec(
            num_scalar_prefetch=1,            # target indices -> SMEM
            grid=(ntiles,),
            in_specs=[
                pl.BlockSpec(memory_space=pl.ANY),                     # X (HBM)
                pl.BlockSpec((w_in, w_out_pad), lambda i, tgt: (0, 0)),
                pl.BlockSpec((1, w_out_pad), lambda i, tgt: (0, 0)),
                pl.BlockSpec((w_out_pad, nc_pad), lambda i, tgt: (0, 0)),
                pl.BlockSpec((1, nc_pad), lambda i, tgt: (0, 0)),
            ],
            out_specs=pl.BlockSpec((tile, nc_pad), lambda i, tgt: (i, 0)),
            scratch_shapes=[
                pltpu.VMEM((tile, w_in), x.dtype),   # gathered row tile
                pltpu.SemaphoreType.DMA,             # shared gather semaphore
            ],
        ),
        compiler_params=pltpu.CompilerParams(
            # Each grid step is self-contained, so "parallel" is safe.
            # TODO(synk): use pltpu.CORE_PARALLEL / pl.core_map on v7x to
            # guarantee both TensorCores are used when ntiles >= 2.
            dimension_semantics=("parallel",),
            vmem_limit_bytes=8 << 20,   # honest need is < 2 MiB even at tile=1024
        ),
    )(tgt, x, wg_pad, bg_pad, wc_pad, bc_pad)


def _xla_gcn_classifier(x, target_idx, wg_pad, bg_pad, wc_pad, bc_pad, out_dtype):
    """Small-T fast path: identical math in plain XLA (no custom-call overhead)."""
    xt = jnp.take(x, target_idx, axis=0).astype(wg_pad.dtype)
    h = jnp.maximum(jnp.dot(xt, wg_pad, preferred_element_type=jnp.float32)
                    + bg_pad, 0.0)
    y = jnp.dot(h.astype(wc_pad.dtype), wc_pad,
                preferred_element_type=jnp.float32) + bc_pad
    return y.astype(out_dtype)


# ----------------------------- parameter setup -------------------------------

def xavier_uniform(key, shape, dtype=jnp.float32):
    fan_out, fan_in = shape
    limit = jnp.sqrt(6.0 / (fan_in + fan_out)).astype(dtype)
    return jax.random.uniform(key, shape, dtype, minval=-limit, maxval=limit)


def init_gtn_params(key, num_edge, num_channels, w_in, w_out, num_class,
                    num_layers):
    """PyTorch-layout parameters (Linear weights are (out, in))."""
    keys = jax.random.split(key, num_layers + 1 + 4)
    # GTConv mixing weights: layer 0 has two convs, later layers one each.
    gtconv_ws = [xavier_uniform(keys[i], (num_channels, num_edge))
                 for i in range(num_layers + 1)]
    k = num_layers + 1
    gcn_w = xavier_uniform(keys[k], (w_out, w_in))
    gcn_b = jax.random.uniform(keys[k + 1], (1, w_out), jnp.float32,
                               minval=-0.1, maxval=0.1)
    lin_w = xavier_uniform(keys[k + 2], (num_class, w_out * num_channels))
    lin_b = jax.random.uniform(keys[k + 3], (1, num_class), jnp.float32,
                               minval=-0.1, maxval=0.1)
    return dict(gtconv_ws=gtconv_ws, gcn_w=gcn_w, gcn_b=gcn_b,
                lin_w=lin_w, lin_b=lin_b)


def prepare_inference_params(params, num_channels, num_class, w_out,
                             compute_dtype=jnp.bfloat16):
    """One-time layout prep:
      * transpose the gcn weight and zero-pad w_out -> multiple of 128 lanes,
      * fold the C-channel concat into one effective classifier weight
        (valid because every channel receives the identical dense h; if the
        sparse metapath path were ever consumed this fold would be wrong),
      * zero-pad num_class -> multiple of 128 (lane-dense output stores),
      * cast weights to `compute_dtype` (bf16 halves HBM bytes / doubles MXU
        throughput; biases and accumulation stay f32).
    """
    gcn_w = jnp.asarray(params["gcn_w"], jnp.float32)          # (w_out, w_in)
    w_in = gcn_w.shape[1]
    w_out_pad = _round_up(w_out, _LANE)
    nc_pad = _round_up(num_class, _LANE)

    wg_pad = jnp.zeros((w_in, w_out_pad), jnp.float32).at[:, :w_out].set(gcn_w.T)
    bg_pad = jnp.zeros((1, w_out_pad), jnp.float32).at[:, :w_out].set(
        jnp.asarray(params["gcn_b"], jnp.float32))

    # cat([h]*C, dim=1) @ lin_w^T == h @ (sum_c lin_w[:, c*w_out:(c+1)*w_out])^T
    lin_w = jnp.asarray(params["lin_w"], jnp.float32)
    w_eff = lin_w.reshape(num_class, num_channels, w_out).sum(axis=1)  # (nc, w_out)
    wc_pad = jnp.zeros((w_out_pad, nc_pad), jnp.float32)
    wc_pad = wc_pad.at[:w_out, :num_class].set(w_eff.T)
    bc_pad = jnp.zeros((1, nc_pad), jnp.float32).at[:, :num_class].set(
        jnp.asarray(params["lin_b"], jnp.float32))

    return dict(gtconv_ws=params["gtconv_ws"],
                gcn_w_pad=wg_pad.astype(compute_dtype),
                gcn_b_pad=bg_pad,
                cls_w_pad=wc_pad.astype(compute_dtype),
                cls_b_pad=bc_pad)


# ------------------------------- GTN forward ---------------------------------

def gtn_forward(prep, X, target_x, num_class, *, use_pallas=None, tile_m=512):
    """Matches GTN.forward(A, X, target_x) with target=None, eval=False."""
    # GTConv mixing weights: tiny (C, num_edge) row softmaxes — plain JAX
    # (a pallas_call per layer would be pure launch overhead).
    all_Ws = [jax.nn.softmax(w, axis=1) for w in prep["gtconv_ws"]]

    # TODO(synk): sparse metapath construction (torch_sparse.coalesce,
    # torch.sparse.mm, scatter_add degree normalization) builds H, which the
    # reference dense path producing y never consumes; omitted here.

    t = int(target_x.shape[0])
    if use_pallas is None:
        use_pallas = t >= _SMALL_T_XLA_THRESHOLD

    if use_pallas:
        y_pad = fused_gather_gcn_classifier(
            X, target_x, prep["gcn_w_pad"], prep["gcn_b_pad"],
            prep["cls_w_pad"], prep["cls_b_pad"], tile_m=tile_m)
        y = y_pad[:t, :num_class]
    else:
        y_pad = _xla_gcn_classifier(
            X, target_x, prep["gcn_w_pad"], prep["gcn_b_pad"],
            prep["cls_w_pad"], prep["cls_b_pad"], X.dtype)
        y = y_pad[:, :num_class]
    return y, all_Ws


# ---------------------------------- main --------------------------------------

if __name__ == "__main__":
    # Small, module-consistent shapes.
    num_edge = 4        # number of edge types (in_channels of GTConv)
    num_channels = 2    # metapath channels
    num_nodes = 16
    w_in = 32
    w_out = 16
    num_class = 3
    num_layers = 2
    num_targets = 8

    key = jax.random.PRNGKey(0)
    k_param, k_x, k_t, k_x2, k_t2 = jax.random.split(key, 5)

    params = init_gtn_params(k_param, num_edge, num_channels, w_in, w_out,
                             num_class, num_layers)
    prep_f32 = prepare_inference_params(params, num_channels, num_class, w_out,
                                        compute_dtype=jnp.float32)
    prep_bf16 = prepare_inference_params(params, num_channels, num_class, w_out,
                                         compute_dtype=jnp.bfloat16)

    X = jax.random.normal(k_x, (num_nodes, w_in), jnp.float32)
    target_x = jax.random.permutation(k_t, num_nodes)[:num_targets]

    def reference_y(Xr, tgt):
        h = jnp.maximum(Xr @ params["gcn_w"].T + params["gcn_b"], 0.0)
        x_cat = jnp.concatenate([h] * num_channels, axis=1)
        return x_cat[tgt] @ params["lin_w"].T + params["lin_b"]

    # 1) Pallas kernel (forced), f32 weights: matches the reference math.
    y_f32, all_Ws = gtn_forward(prep_f32, X, target_x, num_class,
                                use_pallas=True)
    y_f32 = jax.block_until_ready(y_f32)
    all_Ws = [jax.block_until_ready(w) for w in all_Ws]
    y_ref = reference_y(X, target_x)
    assert y_f32.shape == (num_targets, num_class)
    assert jnp.allclose(y_f32, y_ref, atol=1e-4, rtol=1e-4), "f32 kernel mismatch"

    # 2) Pallas kernel, bf16 weights (perf configuration): loose tolerance.
    y_bf16, _ = gtn_forward(prep_bf16, X, target_x, num_class, use_pallas=True)
    y_bf16 = jax.block_until_ready(y_bf16)
    assert jnp.allclose(y_bf16, y_ref, atol=5e-2, rtol=5e-2), "bf16 kernel mismatch"

    # 3) Multi-tile grid + ragged padding + fused gather on a bigger graph.
    X2 = jax.random.normal(k_x2, (96, w_in), jnp.float32)
    target_x2 = jax.random.permutation(k_t2, 96)[:40]
    y2, _ = gtn_forward(prep_f32, X2, target_x2, num_class,
                        use_pallas=True, tile_m=16)
    y2 = jax.block_until_ready(y2)
    assert y2.shape == (40, num_class)
    assert jnp.allclose(y2, reference_y(X2, target_x2), atol=1e-4, rtol=1e-4), \
        "multi-tile kernel mismatch"

    # 4) Small-T auto dispatch takes the plain-XLA fast path.
    y_auto, _ = gtn_forward(prep_f32, X, target_x, num_class)
    y_auto = jax.block_until_ready(y_auto)
    assert jnp.allclose(y_auto, y_ref, atol=1e-4, rtol=1e-4), "XLA path mismatch"

    # GTConv mixing weights (row softmax over edge types).
    for w, ws in zip(params["gtconv_ws"], all_Ws):
        assert jnp.allclose(ws, jax.nn.softmax(w, axis=1), atol=1e-6)

    print("KERNEL_OK")
</pallas_src>

<mosaic_0001>
module attributes {stable_mosaic.version = 11 : i64} {
  func.func @kernel(%arg0: i32, %arg1: memref<8xi32, #tpu.memory_space<smem>>, %arg2: memref<16x32xf32, #tpu.memory_space<any>>, %arg3: memref<32x128xf32, #tpu.memory_space<vmem>>, %arg4: memref<1x128xf32, #tpu.memory_space<vmem>>, %arg5: memref<128x128xf32, #tpu.memory_space<vmem>>, %arg6: memref<1x128xf32, #tpu.memory_space<vmem>>, %arg7: memref<8x128xf32, #tpu.memory_space<vmem>>, %arg8: memref<8x32xf32, #tpu.memory_space<vmem>>, %arg9: memref<!tpu.dma_semaphore, #tpu.memory_space<semaphore_mem>>) attributes {dimension_semantics = [#tpu.dimension_semantics<parallel>], iteration_bounds = array<i64: 1>, scalar_prefetch = 1 : i64, scratch_operands = 2 : i64, tpu.core_type = #tpu.core_type<tc>, window_params = [{}, {pipeline_mode = #tpu.pipeline_mode<synchronous>, transform_indices = @transform_1, window_bounds = array<i64: 32, 128>}, {pipeline_mode = #tpu.pipeline_mode<synchronous>, transform_indices = @transform_2, window_bounds = array<i64: 1, 128>}, {pipeline_mode = #tpu.pipeline_mode<synchronous>, transform_indices = @transform_3, window_bounds = array<i64: 128, 128>}, {pipeline_mode = #tpu.pipeline_mode<synchronous>, transform_indices = @transform_4, window_bounds = array<i64: 1, 128>}, {transform_indices = @transform_5, window_bounds = array<i64: 8, 128>}]} {
    %c8_i32 = arith.constant 8 : i32
    %0 = arith.muli %arg0, %c8_i32 : i32
    %1 = tpu.assume_multiple %0, 8 : i32
    %c0_i32 = arith.constant 0 : i32
    %c8_i32_0 = arith.constant 8 : i32
    %2 = arith.addi %c0_i32, %c8_i32_0 : i32
    %c1_i32 = arith.constant 1 : i32
    scf.for %arg10 = %c0_i32 to %2 step %c1_i32  : i32 {
      %c1_i32_21 = arith.constant 1 : i32
      %25 = arith.muli %arg10, %c1_i32_21 : i32
      %c0_i32_22 = arith.constant 0 : i32
      %26 = arith.addi %c0_i32_22, %25 : i32
      %27 = arith.addi %1, %26 : i32
      %28 = arith.index_cast %27 : i32 to index
      %29 = memref.load %arg1[%28] : memref<8xi32, #tpu.memory_space<smem>>
      %c0_i32_23 = arith.constant 0 : i32
      %30 = tpu.memref_slice %arg2[%29, %c0_i32_23] : memref<16x32xf32, #tpu.memory_space<any>> -> memref<1x32xf32, #tpu.memory_space<any>>
      %c0_i32_24 = arith.constant 0 : i32
      %31 = tpu.memref_slice %arg8[%26, %c0_i32_24] : memref<8x32xf32, #tpu.memory_space<vmem>> -> memref<1x32xf32, #tpu.memory_space<vmem>>
      tpu.enqueue_dma source(%30 : memref<1x32xf32, #tpu.memory_space<any>>) target(%31 : memref<1x32xf32, #tpu.memory_space<vmem>>) target_semaphore(%arg9 : memref<!tpu.dma_semaphore, #tpu.memory_space<semaphore_mem>>)
    }
    %c8_i32_1 = arith.constant 8 : i32
    %c0_i32_2 = arith.constant 0 : i32
    %c8_i32_3 = arith.constant 8 : i32
    %3 = arith.addi %c0_i32_2, %c8_i32_3 : i32
    %c1_i32_4 = arith.constant 1 : i32
    scf.for %arg10 = %c0_i32_2 to %3 step %c1_i32_4  : i32 {
      %c1_i32_21 = arith.constant 1 : i32
      %25 = arith.muli %arg10, %c1_i32_21 : i32
      %c0_i32_22 = arith.constant 0 : i32
      %26 = arith.addi %c0_i32_22, %25 : i32
      %c0_i32_23 = arith.constant 0 : i32
      %c0_i32_24 = arith.constant 0 : i32
      %27 = tpu.memref_slice %arg2[%c0_i32_23, %c0_i32_24] : memref<16x32xf32, #tpu.memory_space<any>> -> memref<1x32xf32, #tpu.memory_space<any>>
      %c0_i32_25 = arith.constant 0 : i32
      %28 = tpu.memref_slice %arg8[%26, %c0_i32_25] : memref<8x32xf32, #tpu.memory_space<vmem>> -> memref<1x32xf32, #tpu.memory_space<vmem>>
      tpu.wait_dma2 semaphore(%arg9 : memref<!tpu.dma_semaphore, #tpu.memory_space<semaphore_mem>>) src(%27 : memref<1x32xf32, #tpu.memory_space<any>>) dst(%28 : memref<1x32xf32, #tpu.memory_space<vmem>>)
    }
    %c8_i32_5 = arith.constant 8 : i32
    %c0 = arith.constant 0 : index
    %c0_6 = arith.constant 0 : index
    %4 = vector.load %arg8[%c0, %c0_6] : memref<8x32xf32, #tpu.memory_space<vmem>>, vector<8x32xf32>
    %c0_7 = arith.constant 0 : index
    %c0_8 = arith.constant 0 : index
    %5 = vector.load %arg3[%c0_7, %c0_8] : memref<32x128xf32, #tpu.memory_space<vmem>>, vector<32x128xf32>
    %cst = arith.constant dense<0.000000e+00> : vector<8x128xf32>
    %6 = tpu.matmul %4, %5, %cst {dimension_numbers = #tpu.dot_dimension_numbers<[1], [0], [0], [1], [0, 0, 1, 1], [], []>} : vector<8x32xf32>, vector<32x128xf32>, vector<8x128xf32> -> vector<8x128xf32>
    %c0_9 = arith.constant 0 : index
    %c0_10 = arith.constant 0 : index
    %7 = vector.load %arg4[%c0_9, %c0_10] : memref<1x128xf32, #tpu.memory_space<vmem>>, vector<1x128xf32>
    %8 = vector.broadcast %7 : vector<1x128xf32> to vector<8x128xf32>
    %9 = arith.addf %6, %8 : vector<8x128xf32>
    %cst_11 = arith.constant 0.000000e+00 : f32
    %10 = vector.broadcast %cst_11 : f32 to vector<8x128xf32>
    %11 = arith.maximumf %9, %10 : vector<8x128xf32>
    %c0_12 = arith.constant 0 : index
    %c0_13 = arith.constant 0 : index
    %12 = vector.load %arg5[%c0_12, %c0_13] : memref<128x128xf32, #tpu.memory_space<vmem>>, vector<128x128xf32>
    %cst_14 = arith.constant dense<0.000000e+00> : vector<8x128xf32>
    %13 = tpu.matmul %11, %12, %cst_14 {dimension_numbers = #tpu.dot_dimension_numbers<[1], [0], [0], [1], [0, 0, 1, 1], [], []>} : vector<8x128xf32>, vector<128x128xf32>, vector<8x128xf32> -> vector<8x128xf32>
    %c0_15 = arith.constant 0 : index
    %c0_16 = arith.constant 0 : index
    %14 = vector.load %arg6[%c0_15, %c0_16] : memref<1x128xf32, #tpu.memory_space<vmem>>, vector<1x128xf32>
    %15 = vector.broadcast %14 : vector<1x128xf32> to vector<8x128xf32>
    %16 = arith.addf %13, %15 : vector<8x128xf32>
    %17 = tpu.iota {dimensions = array<i32: 0>} : vector<8x128xi32>
    %18 = vector.broadcast %1 : i32 to vector<8x128xi32>
    %19 = arith.addi %18, %17 : vector<8x128xi32>
    %c8_i32_17 = arith.constant 8 : i32
    %20 = vector.broadcast %c8_i32_17 : i32 to vector<8x128xi32>
    %21 = arith.cmpi slt, %19, %20 : vector<8x128xi32>
    %cst_18 = arith.constant 0.000000e+00 : f32
    %22 = vector.broadcast %cst_18 : f32 to vector<8x128xf32>
    %23 = arith.select %21, %16, %22 : vector<8x128xi1>, vector<8x128xf32>
    %c0_19 = arith.constant 0 : index
    %c0_20 = arith.constant 0 : index
    %24 = vector.load %arg7[%c0_19, %c0_20] : memref<8x128xf32, #tpu.memory_space<vmem>>, vector<8x128xf32>
    tpu.vector_store %arg7[%c0_19, %c0_20], %23 {strides = array<i32>} : memref<8x128xf32, #tpu.memory_space<vmem>>, vector<8x128xf32>,
    return
  }
  func.func @transform_1(%arg0: i32, %arg1: memref<8xi32, #tpu.memory_space<smem>>) -> (i32, i32) {
    %c0_i32 = arith.constant 0 : i32
    %c0_i32_0 = arith.constant 0 : i32
    %c0_i32_1 = arith.constant 0 : i32
    return %c0_i32, %c0_i32_0 : i32, i32
  }
  func.func @transform_2(%arg0: i32, %arg1: memref<8xi32, #tpu.memory_space<smem>>) -> (i32, i32) {
    %c0_i32 = arith.constant 0 : i32
    %c0_i32_0 = arith.constant 0 : i32
    %c0_i32_1 = arith.constant 0 : i32
    return %c0_i32, %c0_i32_0 : i32, i32
  }
  func.func @transform_3(%arg0: i32, %arg1: memref<8xi32, #tpu.memory_space<smem>>) -> (i32, i32) {
    %c0_i32 = arith.constant 0 : i32
    %c0_i32_0 = arith.constant 0 : i32
    %c0_i32_1 = arith.constant 0 : i32
    return %c0_i32, %c0_i32_0 : i32, i32
  }
  func.func @transform_4(%arg0: i32, %arg1: memref<8xi32, #tpu.memory_space<smem>>) -> (i32, i32) {
    %c0_i32 = arith.constant 0 : i32
    %c0_i32_0 = arith.constant 0 : i32
    %c0_i32_1 = arith.constant 0 : i32
    return %c0_i32, %c0_i32_0 : i32, i32
  }
  func.func @transform_5(%arg0: i32, %arg1: memref<8xi32, #tpu.memory_space<smem>>) -> (i32, i32) {
    %c0_i32 = arith.constant 0 : i32
    %c0_i32_0 = arith.constant 0 : i32
    return %arg0, %c0_i32 : i32, i32
  }
}

</mosaic_0001>

<llo_original>
// kernel: tpu_custom_call.1
$region0: #{tpu_custom_call.1}
  #allocation0 [shape = 'u32[]', space=smem, size = 0x4, offset = 0x4, fixed_abs, tag = 'smem constant byte address 0x4 - core index']
  #allocation1 [shape = 'u32[144,128]{1,0:T(1,128)}', space=vmem, size = 0x12000, scoped, tag = 'internal scratch']
  #allocation2 [shape = 'f32[8,32]{1,0:T(8,128)}', space=vmem, size = 0x1000, scoped, tag = 'scratch operand']
  #allocation3 [shape = 's32[1]{0}', space=sflag, size = 0x4, scoped, tag = 'scratch operand']
  #allocation4 [shape = 's32[1]{0}', space=sflag, size = 0x4, scoped, tag = 'scoped memory for tpu_custom_call.1']
  #allocation5 [shape = 'u8[512]{0}', space=smem, size = 0x200, scoped, tag = 'prefetched SMEM operand 0']
  #allocation12 [shape = 's32[]', space=sflag, size = 0x4, offset = 0, fixed_abs, tag = 'sflag constant byte address 0x0 - dummy sync flag']
  #allocation13 [shape = 's32[]', space=sflag, size = 0x4, offset = 0, fixed_abs, tag = 'sflag constant byte address 0x0 - dummy sync flag']
  #allocation14 [shape = 'u32[]', space=smem, size = 0x4, offset = 0x44, fixed_abs, tag = 'smem constant byte address 0x44 - assertion arg 0']
  #allocation15 [shape = 'u32[]', space=smem, size = 0x4, offset = 0x48, fixed_abs, tag = 'smem constant byte address 0x48 - assertion arg 1']
  %s0 = inlined_call_operand.hbm [shape: s32[8], index: 0, kind: input, shape index: {}]
  %s1 = inlined_call_operand.hbm [shape: f32[16,32], index: 1, kind: input, shape index: {}]
  %s2 = inlined_call_operand.hbm [shape: f32[32,128], index: 2, kind: input, shape index: {}]
  %s3 = inlined_call_operand.vmem [shape: f32[1,128], index: 3, kind: input, shape index: {}]
  %s4 = inlined_call_operand.hbm [shape: f32[128,128], index: 4, kind: input, shape index: {}]
  %s5 = inlined_call_operand.vmem [shape: f32[1,128], index: 5, kind: input, shape index: {}]
  %s6 = inlined_call_operand.hbm [shape: f32[8,128], index: 6, kind: output, shape index: {}]
  %s7 = sld [smem:[#allocation0]]
  $region52: #{tpu_custom_call.1} parent=0
    _
  %s9 = ssub.s32 1, %s7
  %s10 = scalar_select 0, %s9, %s7
  %12 = dma.hbm_to_smem %s0, 16, [#allocation5], [#allocation4]
  %13 = dma.done [#allocation4], 16
  %14 = sfence
  $region1: #{tpu_custom_call.1} parent=0
    #allocation6 [shape = 'u8[16384]{0}', space=vmem, size = 0x4000, scoped, tag = 'input window, operand 2, single buffered']
    #allocation7 [shape = 's32[1]{0}', space=sflag, size = 0x4, scoped, tag = 'scoped memory for tpu_custom_call.1']
    #allocation8 [shape = 's32[1]{0}', space=sflag, size = 0x4, scoped, tag = 'scoped memory for tpu_custom_call.1']
    #allocation9 [shape = 'u8[65536]{0}', space=vmem, size = 0x10000, scoped, tag = 'input window, operand 4, single buffered']
    #allocation10 [shape = 's32[1]{0}', space=sflag, size = 0x4, scoped, tag = 'scoped memory for tpu_custom_call.1']
    #allocation11 [shape = 'u8[4096]{0}', space=vmem, size = 0x1000, scoped, tag = 'output window, operand 0, single buffered']
    %15 = vsyncpa [#allocation7], 0
    %16 = vsyncpa [#allocation10], 0
    %17 = vsyncpa [#allocation8], 0
    // Predicated region
    $region2: #{tpu_custom_call.1} parent=1 // pred_check
      _
    $region3: #{tpu_custom_call.1} parent=1 // pred_check_branch
      %19 = sbr.rel (0) target = $region5
    $region4: #{tpu_custom_call.1} parent=1 // pred_region
      %s21 = ssub.s32 512, 512
      %22 = vsyncadd [#allocation7], %s21
      %s23 = sshll.u32 [#allocation6], 4
      %s24 = int_to_ptr.vmem [resolvable:$true] %s23
      %29 = dma.hbm_to_vmem [thread:$0]  %s2, 512, %s24, [#allocation7], 128, 128, 8
    $region5: #{tpu_custom_call.1} parent=1 // pred_fallthru
      _
    // Predicated region
    $region6: #{tpu_custom_call.1} parent=1 // pred_check
      _
    $region7: #{tpu_custom_call.1} parent=1 // pred_check_branch
      %31 = sbr.rel (0) target = $region9
    $region8: #{tpu_custom_call.1} parent=1 // pred_region
      _
    $region9: #{tpu_custom_call.1} parent=1 // pred_fallthru
      _
    // Predicated region
    $region10: #{tpu_custom_call.1} parent=1 // pred_check
      _
    $region11: #{tpu_custom_call.1} parent=1 // pred_check_branch
      %33 = sbr.rel (0) target = $region13
    $region12: #{tpu_custom_call.1} parent=1 // pred_region
      %s35 = ssub.s32 2048, 2048
      %36 = vsyncadd [#allocation10], %s35
      %s37 = sshll.u32 [#allocation9], 4
      %s38 = int_to_ptr.vmem [resolvable:$true] %s37
      %43 = dma.hbm_to_vmem [thread:$0]  %s4, 2048, %s38, [#allocation10], 128, 128, 8
    $region13: #{tpu_custom_call.1} parent=1 // pred_fallthru
      _
    // Predicated region
    $region14: #{tpu_custom_call.1} parent=1 // pred_check
      _
    $region15: #{tpu_custom_call.1} parent=1 // pred_check_branch
      %45 = sbr.rel (0) target = $region17
    $region16: #{tpu_custom_call.1} parent=1 // pred_region
      _
    $region17: #{tpu_custom_call.1} parent=1 // pred_fallthru
      _
    // Predicated region
    $region18: #{tpu_custom_call.1} parent=1 // pred_check
      _
    $region19: #{tpu_custom_call.1} parent=1 // pred_check_branch
      %47 = sbr.rel (0) target = $region21
    $region20: #{tpu_custom_call.1} parent=1 // pred_region
      %48 = dma.done [#allocation7], 512
    $region21: #{tpu_custom_call.1} parent=1 // pred_fallthru
      _
    // Predicated region
    $region22: #{tpu_custom_call.1} parent=1 // pred_check
      _
    $region23: #{tpu_custom_call.1} parent=1 // pred_check_branch
      %50 = sbr.rel (0) target = $region25
    $region24: #{tpu_custom_call.1} parent=1 // pred_region
      %51 = dma.done [#allocation10], 2048
    $region25: #{tpu_custom_call.1} parent=1 // pred_fallthru
      _
    %s52 = smul.u32 0, 8
    loop: start=0, step=1, limit=8
    $region26: #{tpu_custom_call.1} parent=1 // loop_pre_header
      _
    $region27: #{tpu_custom_call.1} parent=1 // loop_header
      %s54 = sphi 0, %s58
      %p55 = scmp.ge.s32.totalorder %s54, 8
    $region28: #{tpu_custom_call.1} parent=1 // loop_header_branch
      %57 = sbr.rel (%p55) target = $region32
    $region29: #{tpu_custom_call.1} parent=1 // loop_body
      %s59 = sadd.s32 %s52, %s54
      %s60 = sld [smem:[#allocation5 + %s59]]
      %s61 = smul.addr %s60, 16
      %s62 = scalar_lea.hbm %s1, %s61
      %s63 = scalar_lea.vmem [#allocation2], %s54
      // Predicated region
      $region33: #{tpu_custom_call.1} parent=29 // pred_check
        _
      $region34: #{tpu_custom_call.1} parent=29 // pred_check_branch
        %65 = sbr.rel target = $region36
      $region35: #{tpu_custom_call.1} parent=29 // pred_region
        %66 = sst [smem:[#allocation14]] [#allocation13]
        %67 = sst [smem:[#allocation15]] [#allocation12]
      $region36: #{tpu_custom_call.1} parent=29 // pred_fallthru
        _
      %69 = shalt.err (0)
      %s71 = sshll.u32 %s63, 4
      %s72 = int_to_ptr.vmem [resolvable:$true] %s71
      %74 = dma.hbm_to_vmem [thread:$0]  %s62, 16, %s72, [#allocation3]
    $region30: #{tpu_custom_call.1} parent=1 // loop_footer
      %s58 = sadd.s32 1, %s54
    $region31: #{tpu_custom_call.1} parent=1 // loop_footer_branch
      %53 = sbr.rel target = $region27
    $region32: #{tpu_custom_call.1} parent=1 // loop_exit
      _
    loop: start=0, step=1, limit=8
    $region37: #{tpu_custom_call.1} parent=1 // loop_pre_header
      _
    $region38: #{tpu_custom_call.1} parent=1 // loop_header
      %s76 = sphi 0, %s80
      %p77 = scmp.ge.s32.totalorder %s76, 8
    $region39: #{tpu_custom_call.1} parent=1 // loop_header_branch
      %79 = sbr.rel (%p77) target = $region43
    $region40: #{tpu_custom_call.1} parent=1 // loop_body
      %s81 = smul.u32 1, 1
      %s82 = sshll.u32 %s81, 4
      %83 = dma.done [#allocation3], %s82
    $region41: #{tpu_custom_call.1} parent=1 // loop_footer
      %s80 = sadd.s32 1, %s76
    $region42: #{tpu_custom_call.1} parent=1 // loop_footer_branch
      %75 = sbr.rel target = $region38
    $region43: #{tpu_custom_call.1} parent=1 // loop_exit
      _
    %v84 = vld [vmem:[#allocation2] sm:$0xff]
    %v85 = vld [vmem:[#allocation6] sm:$0xff]
    %v86 = vld [vmem:[#allocation6 + $0x8] sm:$0xff]
    %v87 = vld [vmem:[#allocation6 + $0x10] sm:$0xff]
    %v88 = vld [vmem:[#allocation6 + $0x18] sm:$0xff]
    %v89 = vld [vmem:[%s3] sm:$0x1]
    %v91 = vlaneseq
    %v92 = vshrl.u32 %v91, 7
    %v93 = vsub.s32 0, %v92
    %v94 = vrot.slane %v89, %v93
    %vm96 = vcmask 261120
    %v98 = vsel %vm96, %v84, 0
    %100 = vmatprep.subr.mxu0 0.0
    %101 = vmatpush1.msra.mxu0 0.0
    %102 = vmatprep.subr.mxu0 0.0
    %103 = vmatpush1.msra.mxu0 0.0
    %104 = vmatprep.subr.mxu0 0.0
    %105 = vmatpush1.msra.mxu0 0.0
    %106 = vmatprep.subr.mxu0 0.0
    %107 = vmatpush1.msra.mxu0 0.0
    %108 = vmatprep.subr.mxu0 0.0
    %109 = vmatpush1.msra.mxu0 0.0
    %110 = vmatprep.subr.mxu0 0.0
    %111 = vmatpush1.msra.mxu0 0.0
    %112 = vmatprep.subr.mxu0 0.0
    %113 = vmatpush1.msra.mxu0 0.0
    %114 = vmatprep.subr.mxu0 0.0
    %115 = vmatpush1.msra.mxu0 0.0
    %116 = vmatprep.subr.mxu0 0.0
    %117 = vmatpush1.msra.mxu0 0.0
    %118 = vmatprep.subr.mxu0 0.0
    %119 = vmatpush1.msra.mxu0 0.0
    %120 = vmatprep.subr.mxu0 0.0
    %121 = vmatpush1.msra.mxu0 0.0
    %122 = vmatprep.subr.mxu0 0.0
    %123 = vmatpush1.msra.mxu0 0.0
    %124 = vmatprep.subr.mxu0 0.0
    %125 = vmatpush1.msra.mxu0 %v88
    %126 = vmatprep.subr.mxu0 0.0
    %127 = vmatpush1.msra.mxu0 %v87
    %128 = vmatprep.subr.mxu0 0.0
    %129 = vmatpush1.msra.mxu0 %v86
    %130 = vmatprep.subr.mxu0 0.0
    %131 = vmatpush1.msra.mxu0 %v85
    %132 = vmatprep.subr.mxu0 0.0
    %133 = vmatpush2.msra.mxu0 0.0
    %134 = vmatprep.subr.mxu0 0.0
    %135 = vmatpush2.msra.mxu0 0.0
    %136 = vmatprep.subr.mxu0 0.0
    %137 = vmatpush2.msra.mxu0 0.0
    %138 = vmatprep.subr.mxu0 0.0
    %139 = vmatpush2.msra.mxu0 0.0
    %140 = vmatprep.subr.mxu0 0.0
    %141 = vmatpush2.msra.mxu0 0.0
    %142 = vmatprep.subr.mxu0 0.0
    %143 = vmatpush2.msra.mxu0 0.0
    %144 = vmatprep.subr.mxu0 0.0
    %145 = vmatpush2.msra.mxu0 0.0
    %146 = vmatprep.subr.mxu0 0.0
    %147 = vmatpush2.msra.mxu0 0.0
    %148 = vmatprep.subr.mxu0 0.0
    %149 = vmatpush2.msra.mxu0 0.0
    %150 = vmatprep.subr.mxu0 0.0
    %151 = vmatpush2.msra.mxu0 0.0
    %152 = vmatprep.subr.mxu0 0.0
    %153 = vmatpush2.msra.mxu0 0.0
    %154 = vmatprep.subr.mxu0 0.0
    %155 = vmatpush2.msra.mxu0 0.0
    %156 = vmatprep.subr.mxu0 0.0
    %157 = vmatpush2.msra.mxu0 0.0
    %158 = vmatprep.subr.mxu0 0.0
    %159 = vmatpush2.msra.mxu0 0.0
    %160 = vmatprep.subr.mxu0 0.0
    %161 = vmatpush2.msra.mxu0 0.0
    %162 = vmatprep.subr.mxu0 0.0
    %163 = vmatpush2.msra.mxu0 0.0
    %164 = vmatprep.mubr.f32.mxu0 0.0
    %165 = vmatmul.mubr.f32.gmra.mxu0 %v98
    %v166 = vpop.f32.mrf.mxu0
    %v167 = vadd.f32 %v94, %v166
    %v168 = vpop.f32.mrf.mxu0
    %169 = vdwg.mxu0
    %v170 = vmax.f32 %v167, 0.0
    %v171 = vld [vmem:[#allocation9] sm:$0xff]
    %v172 = vld [vmem:[#allocation9 + $0x8] sm:$0xff]
    %v173 = vld [vmem:[#allocation9 + $0x10] sm:$0xff]
    %v174 = vld [vmem:[#allocation9 + $0x18] sm:$0xff]
    %v175 = vld [vmem:[#allocation9 + $0x20] sm:$0xff]
    %v176 = vld [vmem:[#allocation9 + $0x28] sm:$0xff]
    %v177 = vld [vmem:[#allocation9 + $0x30] sm:$0xff]
    %v178 = vld [vmem:[#allocation9 + $0x38] sm:$0xff]
    %v179 = vld [vmem:[#allocation9 + $0x40] sm:$0xff]
    %v180 = vld [vmem:[#allocation9 + $0x48] sm:$0xff]
    %v181 = vld [vmem:[#allocation9 + $0x50] sm:$0xff]
    %v182 = vld [vmem:[#allocation9 + $0x58] sm:$0xff]
    %v183 = vld [vmem:[#allocation9 + $0x60] sm:$0xff]
    %v184 = vld [vmem:[#allocation9 + $0x68] sm:$0xff]
    %v185 = vld [vmem:[#allocation9 + $0x70] sm:$0xff]
    %v186 = vld [vmem:[#allocation9 + $0x78] sm:$0xff]
    %v187 = vld [vmem:[%s5] sm:$0x1]
    %v189 = vlaneseq
    %v190 = vshrl.u32 %v189, 7
    %v191 = vsub.s32 0, %v190
    %v192 = vrot.slane %v187, %v191
    %194 = vmatprep.subr.mxu0 0.0
    %195 = vmatpush1.msra.mxu0 %v186
    %196 = vmatprep.subr.mxu0 0.0
    %197 = vmatpush1.msra.mxu0 %v185
    %198 = vmatprep.subr.mxu0 0.0
    %199 = vmatpush1.msra.mxu0 %v184
    %200 = vmatprep.subr.mxu0 0.0
    %201 = vmatpush1.msra.mxu0 %v183
    %202 = vmatprep.subr.mxu0 0.0
    %203 = vmatpush1.msra.mxu0 %v182
    %204 = vmatprep.subr.mxu0 0.0
    %205 = vmatpush1.msra.mxu0 %v181
    %206 = vmatprep.subr.mxu0 0.0
    %207 = vmatpush1.msra.mxu0 %v180
    %208 = vmatprep.subr.mxu0 0.0
    %209 = vmatpush1.msra.mxu0 %v179
    %210 = vmatprep.subr.mxu0 0.0
    %211 = vmatpush1.msra.mxu0 %v178
    %212 = vmatprep.subr.mxu0 0.0
    %213 = vmatpush1.msra.mxu0 %v177
    %214 = vmatprep.subr.mxu0 0.0
    %215 = vmatpush1.msra.mxu0 %v176
    %216 = vmatprep.subr.mxu0 0.0
    %217 = vmatpush1.msra.mxu0 %v175
    %218 = vmatprep.subr.mxu0 0.0
    %219 = vmatpush1.msra.mxu0 %v174
    %220 = vmatprep.subr.mxu0 0.0
    %221 = vmatpush1.msra.mxu0 %v173
    %222 = vmatprep.subr.mxu0 0.0
    %223 = vmatpush1.msra.mxu0 %v172
    %224 = vmatprep.subr.mxu0 0.0
    %225 = vmatpush1.msra.mxu0 %v171
    %226 = vmatprep.subr.mxu0 0.0
    %227 = vmatpush2.msra.mxu0 0.0
    %228 = vmatprep.subr.mxu0 0.0
    %229 = vmatpush2.msra.mxu0 0.0
    %230 = vmatprep.subr.mxu0 0.0
    %231 = vmatpush2.msra.mxu0 0.0
    %232 = vmatprep.subr.mxu0 0.0
    %233 = vmatpush2.msra.mxu0 0.0
    %234 = vmatprep.subr.mxu0 0.0
    %235 = vmatpush2.msra.mxu0 0.0
    %236 = vmatprep.subr.mxu0 0.0
    %237 = vmatpush2.msra.mxu0 0.0
    %238 = vmatprep.subr.mxu0 0.0
    %239 = vmatpush2.msra.mxu0 0.0
    %240 = vmatprep.subr.mxu0 0.0
    %241 = vmatpush2.msra.mxu0 0.0
    %242 = vmatprep.subr.mxu0 0.0
    %243 = vmatpush2.msra.mxu0 0.0
    %244 = vmatprep.subr.mxu0 0.0
    %245 = vmatpush2.msra.mxu0 0.0
    %246 = vmatprep.subr.mxu0 0.0
    %247 = vmatpush2.msra.mxu0 0.0
    %248 = vmatprep.subr.mxu0 0.0
    %249 = vmatpush2.msra.mxu0 0.0
    %250 = vmatprep.subr.mxu0 0.0
    %251 = vmatpush2.msra.mxu0 0.0
    %252 = vmatprep.subr.mxu0 0.0
    %253 = vmatpush2.msra.mxu0 0.0
    %254 = vmatprep.subr.mxu0 0.0
    %255 = vmatpush2.msra.mxu0 0.0
    %256 = vmatprep.subr.mxu0 0.0
    %257 = vmatpush2.msra.mxu0 0.0
    %258 = vmatprep.mubr.f32.mxu0 0.0
    %259 = vmatmul.mubr.f32.gmra.mxu0 %v170
    %v260 = vpop.f32.mrf.mxu0
    %v261 = vadd.f32 %v192, %v260
    %v262 = vpop.f32.mrf.mxu0
    %263 = vdwg.mxu0
    %v264 = vlaneseq
    %v265 = vshrl.u32 %v264, 7
    %v266 = vstv %s52
    %v267 = vadd.s32 %v266, %v265
    %vm268 = vcmp.lt.s32.totalorder %v267, 8
    %v269 = vsel %vm268, %v261, 0.0
    %270 = vst [vmem:[#allocation11] sm:$0xff] %v269
    // Predicated region
    $region44: #{tpu_custom_call.1} parent=1 // pred_check
      _
    $region45: #{tpu_custom_call.1} parent=1 // pred_check_branch
      %272 = sbr.rel (0) target = $region47
    $region46: #{tpu_custom_call.1} parent=1 // pred_region
      %s274 = ssub.s32 128, 128
      %275 = vsyncadd [#allocation8], %s274
      %s277 = sshll.u32 [#allocation11], 4
      %s278 = int_to_ptr.vmem [resolvable:$true] %s277
      %280 = dma.vmem_to_hbm [thread:$0]  %s278, 128, %s6, [#allocation8]
    $region47: #{tpu_custom_call.1} parent=1 // pred_fallthru
      _
    // Predicated region
    $region48: #{tpu_custom_call.1} parent=1 // pred_check
      _
    $region49: #{tpu_custom_call.1} parent=1 // pred_check_branch
      %282 = sbr.rel (0) target = $region51
    $region50: #{tpu_custom_call.1} parent=1 // pred_region
      %283 = dma.done [#allocation8], 128
    $region51: #{tpu_custom_call.1} parent=1 // pred_fallthru
      _
    %284 = vsyncpa [#allocation7], 1
    %285 = vsyncpa [#allocation10], 1
    %286 = vsyncpa [#allocation8], 1
  %287 = vsyncmov [#allocation3]
  %s288 = vpop.sfrf %287
  %p289 = scmp.eq.s32.totalorder %s288, 0
  %p290 = pneg %p289
  %292 = shalt.err (%p290)

</llo_original>
